<compile_context>
chip_gen: v6e
topology: v6e:2x2x1
jax: 0.10.0
libtpu: 0.0.40
codegen_flags: <defaults>
</compile_context>

<pallas_src>
import jax
import jax.numpy as jnp
from jax import lax
from jax.experimental import pallas as pl
from jax.experimental.pallas import tpu as pltpu

IN_DIM = 35
HIDDEN_DIM = 16
OUTPUT_DIM = 16
PACK = 4                 # batch rows folded into the lane dim (4*32 = 128 lanes)
ROW_GRAN = 64            # batch-tile granularity (packed sublanes multiple of 16)
DEFAULT_TB = 4096        # batch tile (original rows); big => per-step overhead amortized

D_IN = PACK * IN_DIM             # 140
D_H = PACK * HIDDEN_DIM          # 64
D_OUT = PACK * 2 * OUTPUT_DIM    # 128  (lane-dense output slab width)


def _round_up(x, m):
    return ((x + m - 1) // m) * m


def _choose_tiles(B, tb):
    """Pick (num_tiles, rows_per_tile, padded_batch) with balanced tiles."""
    tb = max(ROW_GRAN, _round_up(min(tb, _round_up(B, ROW_GRAN)), ROW_GRAN))
    n = -(-B // tb)
    if n == 1 and B > 2 * ROW_GRAN:
        n = 2            # >= 2 steps so v7x can shard the batch over both TCs
    if n > 1 and n % 2 == 1:
        n += 1           # even step count keeps the two v7x TCs balanced
    tb_eff = _round_up(-(-B // n), ROW_GRAN)   # balanced tiles -> minimal tail padding
    return n, tb_eff, n * tb_eff


def _state_encoder_kernel(x_ref, w1_ref, b1_ref, w2_ref, b2_ref, w3_ref, b3_ref,
                          out_ref):
    # x: (TB/4, 140) = 4 batch rows packed along lanes. Cast to f32 immediately
    # (no-op for f32 input; keeps VPU/EUP work in f32, which v5e requires).
    x = x_ref[...].astype(jnp.float32)
    h = jnp.dot(x, w1_ref[...], preferred_element_type=jnp.float32) + b1_ref[...]
    h = jnp.maximum(h, 0.0)                                            # ReLU
    h = jnp.dot(h, w2_ref[...], preferred_element_type=jnp.float32) + b2_ref[...]
    h = jnp.maximum(h, 0.0)                                            # ReLU
    o = jnp.dot(h, w3_ref[...], preferred_element_type=jnp.float32) + b3_ref[...]  # (TB/4, 128)
    # Within each 32-lane group: lanes [0,16) are mu (identity),
    # lanes [16,32) are log_std -> exp.  Mask mu lanes to 0 before exp so no
    # inf is ever produced (exp runs on the otherwise-idle EUP slot).
    lane = lax.broadcasted_iota(jnp.int32, o.shape, dimension=1)
    is_mu = jnp.bitwise_and(lane, 2 * OUTPUT_DIM - 1) < OUTPUT_DIM
    out_ref[...] = jnp.where(is_mu, o, jnp.exp(jnp.where(is_mu, 0.0, o)))


def state_encoder(s, params, *, tb=DEFAULT_TB):
    """s: (B, 35) float32 or bfloat16. Returns (mu, std), each (B, OUTPUT_DIM) f32."""
    w1, b1, w2, b2, w3, b3 = params
    B = s.shape[0]

    n, tb_eff, B_pad = _choose_tiles(B, tb)
    if B_pad != B:
        s = jnp.pad(s, ((0, B_pad - B), (0, 0)))

    # Fold PACK batch rows into the lane dimension (lane-dense input & output).
    x = s.reshape(B_pad // PACK, D_IN)
    tbp = tb_eff // PACK                     # packed rows per tile (multiple of 16)

    # Block-diagonal weights / tiled biases so each 35-lane (resp. 16/32-lane)
    # group of the packed row goes through its own copy of the layer.
    eye = jnp.eye(PACK, dtype=jnp.float32)
    w1b = jnp.kron(eye, w1.astype(jnp.float32))          # (140, 64)
    w2b = jnp.kron(eye, w2.astype(jnp.float32))          # (64, 64)
    w3b = jnp.kron(eye, w3.astype(jnp.float32))          # (64, 128)
    b1t = jnp.tile(b1.astype(jnp.float32), (1, PACK))    # (1, 64)
    b2t = jnp.tile(b2.astype(jnp.float32), (1, PACK))    # (1, 64)
    b3t = jnp.tile(b3.astype(jnp.float32), (1, PACK))    # (1, 128)

    def const_map(i):
        return (0, 0)

    n_rows = B_pad // PACK
    cost = pl.CostEstimate(
        flops=2 * n_rows * (D_IN * D_H + D_H * D_H + D_H * D_OUT),
        transcendentals=n_rows * D_OUT,
        bytes_accessed=(x.dtype.itemsize * n_rows * D_IN
                        + 4 * (n_rows * D_OUT
                               + D_IN * D_H + D_H
                               + D_H * D_H + D_H
                               + D_H * D_OUT + D_OUT)),
    )

    out = pl.pallas_call(
        _state_encoder_kernel,
        out_shape=jax.ShapeDtypeStruct((n_rows, D_OUT), jnp.float32),
        grid_spec=pltpu.PrefetchScalarGridSpec(
            num_scalar_prefetch=0,
            grid=(n,),
            in_specs=[
                pl.BlockSpec((tbp, D_IN), lambda i: (i, 0)),   # packed input tile
                pl.BlockSpec((D_IN, D_H), const_map),          # w1 (block-diag)
                pl.BlockSpec((1, D_H), const_map),             # b1 (tiled)
                pl.BlockSpec((D_H, D_H), const_map),           # w2 (block-diag)
                pl.BlockSpec((1, D_H), const_map),             # b2 (tiled)
                pl.BlockSpec((D_H, D_OUT), const_map),         # w3 (block-diag)
                pl.BlockSpec((1, D_OUT), const_map),           # b3 (tiled)
            ],
            out_specs=pl.BlockSpec((tbp, D_OUT), lambda i: (i, 0)),  # lane-dense slab
        ),
        compiler_params=pltpu.CompilerParams(
            dimension_semantics=("parallel",)),
        cost_estimate=cost,
    )(x, w1b, b1t, w2b, b2t, w3b, b3t)

    # (B_pad/4, 128) -> (B_pad, 32); row-major order is preserved, so row r is
    # exactly [mu_r (16) | std_r (16)].
    out = out.reshape(B_pad, 2 * OUTPUT_DIM)
    mu = out[:B, :OUTPUT_DIM]
    std = out[:B, OUTPUT_DIM:]
    return mu, std


def init_params(key):
    """Deterministic synthetic parameters matching nn.Linear shapes.
    Stored as (in, out) (= transpose of PyTorch's (out, in))."""
    ks = jax.random.split(key, 6)
    scale = 0.1
    w1 = scale * jax.random.normal(ks[0], (IN_DIM, HIDDEN_DIM), jnp.float32)
    b1 = scale * jax.random.normal(ks[1], (1, HIDDEN_DIM), jnp.float32)
    w2 = scale * jax.random.normal(ks[2], (HIDDEN_DIM, HIDDEN_DIM), jnp.float32)
    b2 = scale * jax.random.normal(ks[3], (1, HIDDEN_DIM), jnp.float32)
    w3 = scale * jax.random.normal(ks[4], (HIDDEN_DIM, 2 * OUTPUT_DIM), jnp.float32)
    b3 = scale * jax.random.normal(ks[5], (1, 2 * OUTPUT_DIM), jnp.float32)
    return (w1, b1, w2, b2, w3, b3)


def reference(s, params):
    """Pure-JAX reference of the PyTorch forward."""
    w1, b1, w2, b2, w3, b3 = params
    h = jnp.maximum(s @ w1 + b1, 0.0)
    h = jnp.maximum(h @ w2 + b2, 0.0)
    o = h @ w3 + b3
    return o[:, :OUTPUT_DIM], jnp.exp(o[:, OUTPUT_DIM:])


if __name__ == "__main__":
    key = jax.random.PRNGKey(0)
    k_param, k_in1, k_in2 = jax.random.split(key, 3)
    params = init_params(k_param)

    # Small batch (single grid step; tile shrinks to the 64-row granule).
    B1 = 16
    s1 = jax.random.normal(k_in1, (B1, IN_DIM), jnp.float32)
    mu1, std1 = state_encoder(s1, params)
    jax.block_until_ready((mu1, std1))
    mu1_ref, std1_ref = reference(s1, params)
    assert mu1.shape == (B1, OUTPUT_DIM) and std1.shape == (B1, OUTPUT_DIM)
    assert jnp.allclose(mu1, mu1_ref, atol=1e-5, rtol=1e-5)
    assert jnp.allclose(std1, std1_ref, atol=1e-5, rtol=1e-5)

    # Ragged batch (exercises padding, balanced tiles, even multi-step grid).
    B2 = 600
    s2 = jax.random.normal(k_in2, (B2, IN_DIM), jnp.float32)
    mu2, std2 = state_encoder(s2, params, tb=256)
    jax.block_until_ready((mu2, std2))
    mu2_ref, std2_ref = reference(s2, params)
    assert mu2.shape == (B2, OUTPUT_DIM) and std2.shape == (B2, OUTPUT_DIM)
    assert jnp.allclose(mu2, mu2_ref, atol=1e-5, rtol=1e-5)
    assert jnp.allclose(std2, std2_ref, atol=1e-5, rtol=1e-5)

    print("KERNEL_OK")
</pallas_src>

<mosaic_0001>
module attributes {stable_mosaic.version = 11 : i64} {
  func.func @_state_encoder_kernel(%arg0: i32, %arg1: memref<16x140xf32, #tpu.memory_space<vmem>>, %arg2: memref<140x64xf32, #tpu.memory_space<vmem>>, %arg3: memref<1x64xf32, #tpu.memory_space<vmem>>, %arg4: memref<64x64xf32, #tpu.memory_space<vmem>>, %arg5: memref<1x64xf32, #tpu.memory_space<vmem>>, %arg6: memref<64x128xf32, #tpu.memory_space<vmem>>, %arg7: memref<1x128xf32, #tpu.memory_space<vmem>>, %arg8: memref<16x128xf32, #tpu.memory_space<vmem>>) attributes {dimension_semantics = [#tpu.dimension_semantics<parallel>], iteration_bounds = array<i64: 1>, scalar_prefetch = 0 : i64, scratch_operands = 0 : i64, tpu.core_type = #tpu.core_type<tc>, window_params = [{transform_indices = @transform_0, window_bounds = array<i64: 16, 140>}, {pipeline_mode = #tpu.pipeline_mode<synchronous>, transform_indices = @transform_1, window_bounds = array<i64: 140, 64>}, {pipeline_mode = #tpu.pipeline_mode<synchronous>, transform_indices = @transform_2, window_bounds = array<i64: 1, 64>}, {pipeline_mode = #tpu.pipeline_mode<synchronous>, transform_indices = @transform_3, window_bounds = array<i64: 64, 64>}, {pipeline_mode = #tpu.pipeline_mode<synchronous>, transform_indices = @transform_4, window_bounds = array<i64: 1, 64>}, {pipeline_mode = #tpu.pipeline_mode<synchronous>, transform_indices = @transform_5, window_bounds = array<i64: 64, 128>}, {pipeline_mode = #tpu.pipeline_mode<synchronous>, transform_indices = @transform_6, window_bounds = array<i64: 1, 128>}, {transform_indices = @transform_7, window_bounds = array<i64: 16, 128>}]} {
    %c0 = arith.constant 0 : index
    %c0_0 = arith.constant 0 : index
    %0 = vector.load %arg1[%c0, %c0_0] : memref<16x140xf32, #tpu.memory_space<vmem>>, vector<16x140xf32>
    %c0_1 = arith.constant 0 : index
    %c0_2 = arith.constant 0 : index
    %1 = vector.load %arg2[%c0_1, %c0_2] : memref<140x64xf32, #tpu.memory_space<vmem>>, vector<140x64xf32>
    %cst = arith.constant dense<0.000000e+00> : vector<16x64xf32>
    %2 = tpu.matmul %0, %1, %cst {dimension_numbers = #tpu.dot_dimension_numbers<[1], [0], [0], [1], [0, 0, 1, 1], [], []>} : vector<16x140xf32>, vector<140x64xf32>, vector<16x64xf32> -> vector<16x64xf32>
    %c0_3 = arith.constant 0 : index
    %c0_4 = arith.constant 0 : index
    %3 = vector.load %arg3[%c0_3, %c0_4] : memref<1x64xf32, #tpu.memory_space<vmem>>, vector<1x64xf32>
    %4 = vector.broadcast %3 : vector<1x64xf32> to vector<16x64xf32>
    %5 = arith.addf %2, %4 : vector<16x64xf32>
    %cst_5 = arith.constant 0.000000e+00 : f32
    %6 = vector.broadcast %cst_5 : f32 to vector<16x64xf32>
    %7 = arith.maximumf %5, %6 : vector<16x64xf32>
    %c0_6 = arith.constant 0 : index
    %c0_7 = arith.constant 0 : index
    %8 = vector.load %arg4[%c0_6, %c0_7] : memref<64x64xf32, #tpu.memory_space<vmem>>, vector<64x64xf32>
    %cst_8 = arith.constant dense<0.000000e+00> : vector<16x64xf32>
    %9 = tpu.matmul %7, %8, %cst_8 {dimension_numbers = #tpu.dot_dimension_numbers<[1], [0], [0], [1], [0, 0, 1, 1], [], []>} : vector<16x64xf32>, vector<64x64xf32>, vector<16x64xf32> -> vector<16x64xf32>
    %c0_9 = arith.constant 0 : index
    %c0_10 = arith.constant 0 : index
    %10 = vector.load %arg5[%c0_9, %c0_10] : memref<1x64xf32, #tpu.memory_space<vmem>>, vector<1x64xf32>
    %11 = vector.broadcast %10 : vector<1x64xf32> to vector<16x64xf32>
    %12 = arith.addf %9, %11 : vector<16x64xf32>
    %cst_11 = arith.constant 0.000000e+00 : f32
    %13 = vector.broadcast %cst_11 : f32 to vector<16x64xf32>
    %14 = arith.maximumf %12, %13 : vector<16x64xf32>
    %c0_12 = arith.constant 0 : index
    %c0_13 = arith.constant 0 : index
    %15 = vector.load %arg6[%c0_12, %c0_13] : memref<64x128xf32, #tpu.memory_space<vmem>>, vector<64x128xf32>
    %cst_14 = arith.constant dense<0.000000e+00> : vector<16x128xf32>
    %16 = tpu.matmul %14, %15, %cst_14 {dimension_numbers = #tpu.dot_dimension_numbers<[1], [0], [0], [1], [0, 0, 1, 1], [], []>} : vector<16x64xf32>, vector<64x128xf32>, vector<16x128xf32> -> vector<16x128xf32>
    %c0_15 = arith.constant 0 : index
    %c0_16 = arith.constant 0 : index
    %17 = vector.load %arg7[%c0_15, %c0_16] : memref<1x128xf32, #tpu.memory_space<vmem>>, vector<1x128xf32>
    %18 = vector.broadcast %17 : vector<1x128xf32> to vector<16x128xf32>
    %19 = arith.addf %16, %18 : vector<16x128xf32>
    %20 = tpu.iota {dimensions = array<i32: 1>} : vector<16x128xi32>
    %c31_i32 = arith.constant 31 : i32
    %21 = vector.broadcast %c31_i32 : i32 to vector<16x128xi32>
    %22 = arith.andi %20, %21 : vector<16x128xi32>
    %c16_i32 = arith.constant 16 : i32
    %23 = vector.broadcast %c16_i32 : i32 to vector<16x128xi32>
    %24 = arith.cmpi slt, %22, %23 : vector<16x128xi32>
    %cst_17 = arith.constant 0.000000e+00 : f32
    %25 = vector.broadcast %cst_17 : f32 to vector<16x128xf32>
    %26 = arith.select %24, %25, %19 : vector<16x128xi1>, vector<16x128xf32>
    %27 = math.exp %26 : vector<16x128xf32>
    %28 = arith.select %24, %19, %27 : vector<16x128xi1>, vector<16x128xf32>
    %c0_18 = arith.constant 0 : index
    %c0_19 = arith.constant 0 : index
    %29 = vector.load %arg8[%c0_18, %c0_19] : memref<16x128xf32, #tpu.memory_space<vmem>>, vector<16x128xf32>
    tpu.vector_store %arg8[%c0_18, %c0_19], %28 {strides = array<i32>} : memref<16x128xf32, #tpu.memory_space<vmem>>, vector<16x128xf32>,
    return
  }
  func.func @transform_0(%arg0: i32) -> (i32, i32) {
    %c0_i32 = arith.constant 0 : i32
    %c0_i32_0 = arith.constant 0 : i32
    return %arg0, %c0_i32 : i32, i32
  }
  func.func @transform_1(%arg0: i32) -> (i32, i32) {
    %c0_i32 = arith.constant 0 : i32
    %c0_i32_0 = arith.constant 0 : i32
    %c0_i32_1 = arith.constant 0 : i32
    return %c0_i32, %c0_i32_0 : i32, i32
  }
  func.func @transform_2(%arg0: i32) -> (i32, i32) {
    %c0_i32 = arith.constant 0 : i32
    %c0_i32_0 = arith.constant 0 : i32
    %c0_i32_1 = arith.constant 0 : i32
    return %c0_i32, %c0_i32_0 : i32, i32
  }
  func.func @transform_3(%arg0: i32) -> (i32, i32) {
    %c0_i32 = arith.constant 0 : i32
    %c0_i32_0 = arith.constant 0 : i32
    %c0_i32_1 = arith.constant 0 : i32
    return %c0_i32, %c0_i32_0 : i32, i32
  }
  func.func @transform_4(%arg0: i32) -> (i32, i32) {
    %c0_i32 = arith.constant 0 : i32
    %c0_i32_0 = arith.constant 0 : i32
    %c0_i32_1 = arith.constant 0 : i32
    return %c0_i32, %c0_i32_0 : i32, i32
  }
  func.func @transform_5(%arg0: i32) -> (i32, i32) {
    %c0_i32 = arith.constant 0 : i32
    %c0_i32_0 = arith.constant 0 : i32
    %c0_i32_1 = arith.constant 0 : i32
    return %c0_i32, %c0_i32_0 : i32, i32
  }
  func.func @transform_6(%arg0: i32) -> (i32, i32) {
    %c0_i32 = arith.constant 0 : i32
    %c0_i32_0 = arith.constant 0 : i32
    %c0_i32_1 = arith.constant 0 : i32
    return %c0_i32, %c0_i32_0 : i32, i32
  }
  func.func @transform_7(%arg0: i32) -> (i32, i32) {
    %c0_i32 = arith.constant 0 : i32
    %c0_i32_0 = arith.constant 0 : i32
    return %arg0, %c0_i32 : i32, i32
  }
}

</mosaic_0001>

<llo_original>
// kernel: tpu_custom_call.1
$region0: #{tpu_custom_call.1}
  #allocation0 [shape = 'u32[]', space=smem, size = 0x4, offset = 0x4, fixed_abs, tag = 'smem constant byte address 0x4 - core index']
  #allocation1 [shape = 'u32[144,128]{1,0:T(1,128)}', space=vmem, size = 0x12000, scoped, tag = 'internal scratch']
  %s0 = inlined_call_operand.vmem [shape: f32[16,140], index: 0, kind: input, shape index: {}]
  %s1 = inlined_call_operand.vmem [shape: f32[140,64], index: 1, kind: input, shape index: {}]
  %s2 = inlined_call_operand.vmem [shape: f32[1,64], index: 2, kind: input, shape index: {}]
  %s3 = inlined_call_operand.vmem [shape: f32[64,64], index: 3, kind: input, shape index: {}]
  %s4 = inlined_call_operand.vmem [shape: f32[1,64], index: 4, kind: input, shape index: {}]
  %s5 = inlined_call_operand.vmem [shape: f32[64,128], index: 5, kind: input, shape index: {}]
  %s6 = inlined_call_operand.vmem [shape: f32[1,128], index: 6, kind: input, shape index: {}]
  %s7 = inlined_call_operand.hbm [shape: f32[16,128], index: 7, kind: output, shape index: {}]
  %s8 = sld [smem:[#allocation0]]
  $region38: #{tpu_custom_call.1} parent=0
    _
  %s10 = ssub.s32 1, %s8
  %s11 = scalar_select 0, %s10, %s8
  $region1: #{tpu_custom_call.1} parent=0
    #allocation2 [shape = 'u8[8192]{0}', space=vmem, size = 0x2000, scoped, tag = 'output window, operand 0, single buffered']
    #allocation3 [shape = 's32[1]{0}', space=sflag, size = 0x4, scoped, tag = 'scoped memory for tpu_custom_call.1']
    %12 = vsyncpa [#allocation3], 0
    // Predicated region
    $region2: #{tpu_custom_call.1} parent=1 // pred_check
      _
    $region3: #{tpu_custom_call.1} parent=1 // pred_check_branch
      %14 = sbr.rel (0) target = $region5
    $region4: #{tpu_custom_call.1} parent=1 // pred_region
      _
    $region5: #{tpu_custom_call.1} parent=1 // pred_fallthru
      _
    // Predicated region
    $region6: #{tpu_custom_call.1} parent=1 // pred_check
      _
    $region7: #{tpu_custom_call.1} parent=1 // pred_check_branch
      %16 = sbr.rel (0) target = $region9
    $region8: #{tpu_custom_call.1} parent=1 // pred_region
      _
    $region9: #{tpu_custom_call.1} parent=1 // pred_fallthru
      _
    // Predicated region
    $region10: #{tpu_custom_call.1} parent=1 // pred_check
      _
    $region11: #{tpu_custom_call.1} parent=1 // pred_check_branch
      %18 = sbr.rel (0) target = $region13
    $region12: #{tpu_custom_call.1} parent=1 // pred_region
      _
    $region13: #{tpu_custom_call.1} parent=1 // pred_fallthru
      _
    // Predicated region
    $region14: #{tpu_custom_call.1} parent=1 // pred_check
      _
    $region15: #{tpu_custom_call.1} parent=1 // pred_check_branch
      %20 = sbr.rel (0) target = $region17
    $region16: #{tpu_custom_call.1} parent=1 // pred_region
      _
    $region17: #{tpu_custom_call.1} parent=1 // pred_fallthru
      _
    // Predicated region
    $region18: #{tpu_custom_call.1} parent=1 // pred_check
      _
    $region19: #{tpu_custom_call.1} parent=1 // pred_check_branch
      %22 = sbr.rel (0) target = $region21
    $region20: #{tpu_custom_call.1} parent=1 // pred_region
      _
    $region21: #{tpu_custom_call.1} parent=1 // pred_fallthru
      _
    // Predicated region
    $region22: #{tpu_custom_call.1} parent=1 // pred_check
      _
    $region23: #{tpu_custom_call.1} parent=1 // pred_check_branch
      %24 = sbr.rel (0) target = $region25
    $region24: #{tpu_custom_call.1} parent=1 // pred_region
      _
    $region25: #{tpu_custom_call.1} parent=1 // pred_fallthru
      _
    // Predicated region
    $region26: #{tpu_custom_call.1} parent=1 // pred_check
      _
    $region27: #{tpu_custom_call.1} parent=1 // pred_check_branch
      %26 = sbr.rel (0) target = $region29
    $region28: #{tpu_custom_call.1} parent=1 // pred_region
      _
    $region29: #{tpu_custom_call.1} parent=1 // pred_fallthru
      _
    %v27 = vld [vmem:[%s0] sm:$0xff]
    %v28 = vld [vmem:[%s0 + $0x8] sm:$0xff]
    %v29 = vld [vmem:[%s0 + $0x10] sm:$0xff]
    %v30 = vld [vmem:[%s0 + $0x18] sm:$0xff]
    %v31 = vld [vmem:[%s1] sm:$0xff]
    %v32 = vld [vmem:[%s1 + $0x8] sm:$0xff]
    %v33 = vld [vmem:[%s1 + $0x10] sm:$0xff]
    %v34 = vld [vmem:[%s1 + $0x18] sm:$0xff]
    %v35 = vld [vmem:[%s1 + $0x20] sm:$0xff]
    %v36 = vld [vmem:[%s1 + $0x28] sm:$0xff]
    %v37 = vld [vmem:[%s1 + $0x30] sm:$0xff]
    %v38 = vld [vmem:[%s1 + $0x38] sm:$0xff]
    %v39 = vld [vmem:[%s1 + $0x40] sm:$0xff]
    %v40 = vld [vmem:[%s1 + $0x48] sm:$0xff]
    %v41 = vld [vmem:[%s1 + $0x50] sm:$0xff]
    %v42 = vld [vmem:[%s1 + $0x58] sm:$0xff]
    %v43 = vld [vmem:[%s1 + $0x60] sm:$0xff]
    %v44 = vld [vmem:[%s1 + $0x68] sm:$0xff]
    %v45 = vld [vmem:[%s1 + $0x70] sm:$0xff]
    %v46 = vld [vmem:[%s1 + $0x78] sm:$0xff]
    %v47 = vld [vmem:[%s1 + $0x80] sm:$0xff]
    %v48 = vld [vmem:[%s1 + $0x88] sm:$0xf]
    %v49 = vld [vmem:[%s2] sm:$0x1]
    %v51 = vlaneseq
    %v52 = vshrl.u32 %v51, 7
    %v53 = vsub.s32 0, %v52
    %v54 = vrot.slane %v49, %v53
    %vm56 = vcmask 97280
    %v58 = vsel %vm56, %v28, 0
    %v61 = vsel %vm56, %v30, 0
    %vm63 = vcmask 1043456
    %v65 = vsel %vm63, %v48, 0
    %67 = vmatprep.subr.mxu0 0.0
    %68 = vmatpush1.msra.mxu0 %v46
    %69 = vmatprep.subr.mxu0 0.0
    %70 = vmatpush1.msra.mxu0 %v45
    %71 = vmatprep.subr.mxu0 0.0
    %72 = vmatpush1.msra.mxu0 %v44
    %73 = vmatprep.subr.mxu0 0.0
    %74 = vmatpush1.msra.mxu0 %v43
    %75 = vmatprep.subr.mxu0 0.0
    %76 = vmatpush1.msra.mxu0 %v42
    %77 = vmatprep.subr.mxu0 0.0
    %78 = vmatpush1.msra.mxu0 %v41
    %79 = vmatprep.subr.mxu0 0.0
    %80 = vmatpush1.msra.mxu0 %v40
    %81 = vmatprep.subr.mxu0 0.0
    %82 = vmatpush1.msra.mxu0 %v39
    %83 = vmatprep.subr.mxu0 0.0
    %84 = vmatpush1.msra.mxu0 %v38
    %85 = vmatprep.subr.mxu0 0.0
    %86 = vmatpush1.msra.mxu0 %v37
    %87 = vmatprep.subr.mxu0 0.0
    %88 = vmatpush1.msra.mxu0 %v36
    %89 = vmatprep.subr.mxu0 0.0
    %90 = vmatpush1.msra.mxu0 %v35
    %91 = vmatprep.subr.mxu0 0.0
    %92 = vmatpush1.msra.mxu0 %v34
    %93 = vmatprep.subr.mxu0 0.0
    %94 = vmatpush1.msra.mxu0 %v33
    %95 = vmatprep.subr.mxu0 0.0
    %96 = vmatpush1.msra.mxu0 %v32
    %97 = vmatprep.subr.mxu0 0.0
    %98 = vmatpush1.msra.mxu0 %v31
    %99 = vmatprep.subr.mxu0 0.0
    %100 = vmatpush2.msra.mxu0 0.0
    %101 = vmatprep.subr.mxu0 0.0
    %102 = vmatpush2.msra.mxu0 0.0
    %103 = vmatprep.subr.mxu0 0.0
    %104 = vmatpush2.msra.mxu0 0.0
    %105 = vmatprep.subr.mxu0 0.0
    %106 = vmatpush2.msra.mxu0 0.0
    %107 = vmatprep.subr.mxu0 0.0
    %108 = vmatpush2.msra.mxu0 0.0
    %109 = vmatprep.subr.mxu0 0.0
    %110 = vmatpush2.msra.mxu0 0.0
    %111 = vmatprep.subr.mxu0 0.0
    %112 = vmatpush2.msra.mxu0 0.0
    %113 = vmatprep.subr.mxu0 0.0
    %114 = vmatpush2.msra.mxu0 0.0
    %115 = vmatprep.subr.mxu0 0.0
    %116 = vmatpush2.msra.mxu0 0.0
    %117 = vmatprep.subr.mxu0 0.0
    %118 = vmatpush2.msra.mxu0 0.0
    %119 = vmatprep.subr.mxu0 0.0
    %120 = vmatpush2.msra.mxu0 0.0
    %121 = vmatprep.subr.mxu0 0.0
    %122 = vmatpush2.msra.mxu0 0.0
    %123 = vmatprep.subr.mxu0 0.0
    %124 = vmatpush2.msra.mxu0 0.0
    %125 = vmatprep.subr.mxu0 0.0
    %126 = vmatpush2.msra.mxu0 0.0
    %127 = vmatprep.subr.mxu0 0.0
    %128 = vmatpush2.msra.mxu0 %v65
    %129 = vmatprep.subr.mxu0 0.0
    %130 = vmatpush2.msra.mxu0 %v47
    %131 = vmatprep.mubr.f32.mxu0 %v58
    %132 = vmatmul.mubr.f32.gmra.mxu0 %v27
    %v133 = vpop.f32.mrf.mxu0
    %v134 = vadd.f32 %v54, %v133
    %v135 = vpop.f32.mrf.mxu0
    %136 = vmatprep.mubr.f32.mxu0 %v61
    %137 = vmatmul.mubr.f32.gmra.mxu0 %v29
    %v138 = vpop.f32.mrf.mxu0
    %v139 = vadd.f32 %v54, %v138
    %v140 = vpop.f32.mrf.mxu0
    %141 = vdwg.mxu0
    %v142 = vmax.f32 %v134, 0.0
    %v143 = vmax.f32 %v139, 0.0
    %v144 = vld [vmem:[%s3] sm:$0xff]
    %v145 = vld [vmem:[%s3 + $0x8] sm:$0xff]
    %v146 = vld [vmem:[%s3 + $0x10] sm:$0xff]
    %v147 = vld [vmem:[%s3 + $0x18] sm:$0xff]
    %v148 = vld [vmem:[%s3 + $0x20] sm:$0xff]
    %v149 = vld [vmem:[%s3 + $0x28] sm:$0xff]
    %v150 = vld [vmem:[%s3 + $0x30] sm:$0xff]
    %v151 = vld [vmem:[%s3 + $0x38] sm:$0xff]
    %v152 = vld [vmem:[%s4] sm:$0x1]
    %v154 = vlaneseq
    %v155 = vshrl.u32 %v154, 7
    %v156 = vsub.s32 0, %v155
    %v157 = vrot.slane %v152, %v156
    %vm159 = vcmask 523264
    %v161 = vsel %vm159, %v142, 0
    %v164 = vsel %vm159, %v143, 0
    %166 = vmatprep.subr.mxu0 0.0
    %167 = vmatpush1.msra.mxu0 0.0
    %168 = vmatprep.subr.mxu0 0.0
    %169 = vmatpush1.msra.mxu0 0.0
    %170 = vmatprep.subr.mxu0 0.0
    %171 = vmatpush1.msra.mxu0 0.0
    %172 = vmatprep.subr.mxu0 0.0
    %173 = vmatpush1.msra.mxu0 0.0
    %174 = vmatprep.subr.mxu0 0.0
    %175 = vmatpush1.msra.mxu0 0.0
    %176 = vmatprep.subr.mxu0 0.0
    %177 = vmatpush1.msra.mxu0 0.0
    %178 = vmatprep.subr.mxu0 0.0
    %179 = vmatpush1.msra.mxu0 0.0
    %180 = vmatprep.subr.mxu0 0.0
    %181 = vmatpush1.msra.mxu0 0.0
    %182 = vmatprep.subr.mxu0 0.0
    %183 = vmatpush1.msra.mxu0 %v151
    %184 = vmatprep.subr.mxu0 0.0
    %185 = vmatpush1.msra.mxu0 %v150
    %186 = vmatprep.subr.mxu0 0.0
    %187 = vmatpush1.msra.mxu0 %v149
    %188 = vmatprep.subr.mxu0 0.0
    %189 = vmatpush1.msra.mxu0 %v148
    %190 = vmatprep.subr.mxu0 0.0
    %191 = vmatpush1.msra.mxu0 %v147
    %192 = vmatprep.subr.mxu0 0.0
    %193 = vmatpush1.msra.mxu0 %v146
    %194 = vmatprep.subr.mxu0 0.0
    %195 = vmatpush1.msra.mxu0 %v145
    %196 = vmatprep.subr.mxu0 0.0
    %197 = vmatpush1.msra.mxu0 %v144
    %198 = vmatprep.subr.mxu0 0.0
    %199 = vmatpush2.msra.mxu0 0.0
    %200 = vmatprep.subr.mxu0 0.0
    %201 = vmatpush2.msra.mxu0 0.0
    %202 = vmatprep.subr.mxu0 0.0
    %203 = vmatpush2.msra.mxu0 0.0
    %204 = vmatprep.subr.mxu0 0.0
    %205 = vmatpush2.msra.mxu0 0.0
    %206 = vmatprep.subr.mxu0 0.0
    %207 = vmatpush2.msra.mxu0 0.0
    %208 = vmatprep.subr.mxu0 0.0
    %209 = vmatpush2.msra.mxu0 0.0
    %210 = vmatprep.subr.mxu0 0.0
    %211 = vmatpush2.msra.mxu0 0.0
    %212 = vmatprep.subr.mxu0 0.0
    %213 = vmatpush2.msra.mxu0 0.0
    %214 = vmatprep.subr.mxu0 0.0
    %215 = vmatpush2.msra.mxu0 0.0
    %216 = vmatprep.subr.mxu0 0.0
    %217 = vmatpush2.msra.mxu0 0.0
    %218 = vmatprep.subr.mxu0 0.0
    %219 = vmatpush2.msra.mxu0 0.0
    %220 = vmatprep.subr.mxu0 0.0
    %221 = vmatpush2.msra.mxu0 0.0
    %222 = vmatprep.subr.mxu0 0.0
    %223 = vmatpush2.msra.mxu0 0.0
    %224 = vmatprep.subr.mxu0 0.0
    %225 = vmatpush2.msra.mxu0 0.0
    %226 = vmatprep.subr.mxu0 0.0
    %227 = vmatpush2.msra.mxu0 0.0
    %228 = vmatprep.subr.mxu0 0.0
    %229 = vmatpush2.msra.mxu0 0.0
    %230 = vmatprep.mubr.f32.mxu0 0.0
    %231 = vmatmul.mubr.f32.gmra.mxu0 %v161
    %v232 = vpop.f32.mrf.mxu0
    %v233 = vadd.f32 %v157, %v232
    %v234 = vpop.f32.mrf.mxu0
    %235 = vmatprep.mubr.f32.mxu0 0.0
    %236 = vmatmul.mubr.f32.gmra.mxu0 %v164
    %v237 = vpop.f32.mrf.mxu0
    %v238 = vadd.f32 %v157, %v237
    %v239 = vpop.f32.mrf.mxu0
    %240 = vdwg.mxu0
    %v241 = vmax.f32 %v233, 0.0
    %v242 = vmax.f32 %v238, 0.0
    %v243 = vld [vmem:[%s5] sm:$0xff]
    %v244 = vld [vmem:[%s5 + $0x8] sm:$0xff]
    %v245 = vld [vmem:[%s5 + $0x10] sm:$0xff]
    %v246 = vld [vmem:[%s5 + $0x18] sm:$0xff]
    %v247 = vld [vmem:[%s5 + $0x20] sm:$0xff]
    %v248 = vld [vmem:[%s5 + $0x28] sm:$0xff]
    %v249 = vld [vmem:[%s5 + $0x30] sm:$0xff]
    %v250 = vld [vmem:[%s5 + $0x38] sm:$0xff]
    %v251 = vld [vmem:[%s6] sm:$0x1]
    %v253 = vlaneseq
    %v254 = vshrl.u32 %v253, 7
    %v255 = vsub.s32 0, %v254
    %v256 = vrot.slane %v251, %v255
    %v259 = vsel %vm159, %v241, 0
    %v262 = vsel %vm159, %v242, 0
    %264 = vmatprep.subr.mxu0 0.0
    %265 = vmatpush1.msra.mxu0 0.0
    %266 = vmatprep.subr.mxu0 0.0
    %267 = vmatpush1.msra.mxu0 0.0
    %268 = vmatprep.subr.mxu0 0.0
    %269 = vmatpush1.msra.mxu0 0.0
    %270 = vmatprep.subr.mxu0 0.0
    %271 = vmatpush1.msra.mxu0 0.0
    %272 = vmatprep.subr.mxu0 0.0
    %273 = vmatpush1.msra.mxu0 0.0
    %274 = vmatprep.subr.mxu0 0.0
    %275 = vmatpush1.msra.mxu0 0.0
    %276 = vmatprep.subr.mxu0 0.0
    %277 = vmatpush1.msra.mxu0 0.0
    %278 = vmatprep.subr.mxu0 0.0
    %279 = vmatpush1.msra.mxu0 0.0
    %280 = vmatprep.subr.mxu0 0.0
    %281 = vmatpush1.msra.mxu0 %v250
    %282 = vmatprep.subr.mxu0 0.0
    %283 = vmatpush1.msra.mxu0 %v249
    %284 = vmatprep.subr.mxu0 0.0
    %285 = vmatpush1.msra.mxu0 %v248
    %286 = vmatprep.subr.mxu0 0.0
    %287 = vmatpush1.msra.mxu0 %v247
    %288 = vmatprep.subr.mxu0 0.0
    %289 = vmatpush1.msra.mxu0 %v246
    %290 = vmatprep.subr.mxu0 0.0
    %291 = vmatpush1.msra.mxu0 %v245
    %292 = vmatprep.subr.mxu0 0.0
    %293 = vmatpush1.msra.mxu0 %v244
    %294 = vmatprep.subr.mxu0 0.0
    %295 = vmatpush1.msra.mxu0 %v243
    %296 = vmatprep.subr.mxu0 0.0
    %297 = vmatpush2.msra.mxu0 0.0
    %298 = vmatprep.subr.mxu0 0.0
    %299 = vmatpush2.msra.mxu0 0.0
    %300 = vmatprep.subr.mxu0 0.0
    %301 = vmatpush2.msra.mxu0 0.0
    %302 = vmatprep.subr.mxu0 0.0
    %303 = vmatpush2.msra.mxu0 0.0
    %304 = vmatprep.subr.mxu0 0.0
    %305 = vmatpush2.msra.mxu0 0.0
    %306 = vmatprep.subr.mxu0 0.0
    %307 = vmatpush2.msra.mxu0 0.0
    %308 = vmatprep.subr.mxu0 0.0
    %309 = vmatpush2.msra.mxu0 0.0
    %310 = vmatprep.subr.mxu0 0.0
    %311 = vmatpush2.msra.mxu0 0.0
    %312 = vmatprep.subr.mxu0 0.0
    %313 = vmatpush2.msra.mxu0 0.0
    %314 = vmatprep.subr.mxu0 0.0
    %315 = vmatpush2.msra.mxu0 0.0
    %316 = vmatprep.subr.mxu0 0.0
    %317 = vmatpush2.msra.mxu0 0.0
    %318 = vmatprep.subr.mxu0 0.0
    %319 = vmatpush2.msra.mxu0 0.0
    %320 = vmatprep.subr.mxu0 0.0
    %321 = vmatpush2.msra.mxu0 0.0
    %322 = vmatprep.subr.mxu0 0.0
    %323 = vmatpush2.msra.mxu0 0.0
    %324 = vmatprep.subr.mxu0 0.0
    %325 = vmatpush2.msra.mxu0 0.0
    %326 = vmatprep.subr.mxu0 0.0
    %327 = vmatpush2.msra.mxu0 0.0
    %328 = vmatprep.mubr.f32.mxu0 0.0
    %329 = vmatmul.mubr.f32.gmra.mxu0 %v259
    %v330 = vpop.f32.mrf.mxu0
    %v331 = vadd.f32 %v256, %v330
    %v332 = vpop.f32.mrf.mxu0
    %333 = vmatprep.mubr.f32.mxu0 0.0
    %334 = vmatmul.mubr.f32.gmra.mxu0 %v262
    %v335 = vpop.f32.mrf.mxu0
    %v336 = vadd.f32 %v256, %v335
    %v337 = vpop.f32.mrf.mxu0
    %338 = vdwg.mxu0
    %v339 = vlaneseq
    %v340 = vand.u32 %v339, 127
    %v341 = vand.u32 %v340, 31
    %vm342 = vcmp.lt.s32.totalorder %v341, 16
    %v343 = vsel %vm342, 0.0, %v331
    %v344 = vsel %vm342, 0.0, %v336
    %v345 = vmul.f32 %v343, 1.442695
    %v346 = vpow.pop %v345
    %v347 = vmul.f32 %v344, 1.442695
    %v348 = vpow.pop %v347
    %v349 = vsel %vm342, %v331, %v346
    %v350 = vsel %vm342, %v336, %v348
    %351 = vst [vmem:[#allocation2] sm:$0xff] %v349
    %352 = vst [vmem:[#allocation2 + $0x8] sm:$0xff] %v350
    // Predicated region
    $region30: #{tpu_custom_call.1} parent=1 // pred_check
      _
    $region31: #{tpu_custom_call.1} parent=1 // pred_check_branch
      %354 = sbr.rel (0) target = $region33
    $region32: #{tpu_custom_call.1} parent=1 // pred_region
      %s356 = ssub.s32 256, 256
      %357 = vsyncadd [#allocation3], %s356
      %s358 = sshll.u32 [#allocation2], 4
      %s359 = int_to_ptr.vmem [resolvable:$true] %s358
      %364 = dma.vmem_to_hbm [thread:$0]  %s359, 256, %s7, [#allocation3], 128, 128, 8
    $region33: #{tpu_custom_call.1} parent=1 // pred_fallthru
      _
    // Predicated region
    $region34: #{tpu_custom_call.1} parent=1 // pred_check
      _
    $region35: #{tpu_custom_call.1} parent=1 // pred_check_branch
      %366 = sbr.rel (0) target = $region37
    $region36: #{tpu_custom_call.1} parent=1 // pred_region
      %367 = dma.done [#allocation3], 256
    $region37: #{tpu_custom_call.1} parent=1 // pred_fallthru
      _
    %368 = vsyncpa [#allocation3], 1

</llo_original>
